<compile_context>
chip_gen: v7x
topology: tpu7x:2x2x1
jax: 0.10.0
libtpu: 0.0.40
codegen_flags: <defaults>
</compile_context>

<pallas_src>
import functools

import jax
import jax.numpy as jnp
from jax.experimental import pallas as pl
from jax.experimental.pallas import tpu as pltpu

# ---- problem sizes (small, consistent with the module) ----------------------
N, C_IN, H, W = 2, 4, 16, 16          # input  (NCHW)
C_OUT, KH, KW = 8, 3, 3               # Conv2d(features_in=4, features_out=8, k=3)


def _make_conv_block_kernel(n, c_in, c_out, h, w, kh, kw):
    ho = h - kh + 1

    def kernel(t_ref, b_ref, drop_ref, plm_ref, prm_ref, x_ref, o_ref, s_ref):
        """Single invocation, whole batch.

        t_ref    : VMEM (C_IN*KH*W, C_OUT*WO)  banded conv-weight matrix
        b_ref    : VMEM (1, C_OUT*WO)          bias row
        drop_ref : VMEM (N*HP, C_OUT*WP)       per-(sample, channel) Dropout2d scale
        plm_ref  : VMEM (N*HP, N*HO)           row-pooling matrix (block-diag, 0.5 pairs)
        prm_ref  : VMEM (C_OUT*WO, C_OUT*WP)   col-pooling matrix (block-diag, 0.5 pairs)
        x_ref    : VMEM (N, C_IN, H, W)        input batch
        o_ref    : VMEM (N*HP, C_OUT*WP)       output slab (lane-dense, single store)
        s_ref    : VMEM (N*HO, C_IN*KH*W)      staged shifted row slabs (scratch)
        """
        # Stage shifted row slabs (im2col without reshapes): the lane axis stays W-wide,
        # so every copy is a plain 2-D slice of matching shape.
        for nn in range(n):
            for ci in range(c_in):
                for ky in range(kh):
                    s_ref[pl.ds(nn * ho, ho), pl.ds((ci * kh + ky) * w, w)] = (
                        x_ref[nn, ci, pl.ds(ky, ho), :].astype(jnp.float32)
                    )

        # Convolution for the whole batch as ONE MXU matmul against the banded weights,
        # then bias + ReLU as two vector ops on the (N*HO, C_OUT*WO) slab.
        conv = jnp.dot(s_ref[...], t_ref[...], preferred_element_type=jnp.float32)
        y = jnp.maximum(conv + b_ref[...], 0.0)

        # 2x2 average pool as two block-diagonal matmuls.
        z = jnp.dot(plm_ref[...], y, preferred_element_type=jnp.float32)    # (N*HP, C_OUT*WO)
        z = jnp.dot(z, prm_ref[...], preferred_element_type=jnp.float32)    # (N*HP, C_OUT*WP)

        # Dropout2d scale + single lane-dense store.
        o_ref[...] = (z * drop_ref[...]).astype(o_ref.dtype)

    return kernel


@functools.partial(jax.jit, static_argnames=("training", "p"))
def conv_block_forward(x, weight, bias, drop_key, training=False, p=0.5):
    """x: (N, C_IN, H, W) f32, weight: (C_OUT, C_IN, KH, KW) OIHW, bias: (C_OUT,)."""
    f32 = jnp.float32
    n, c_in, h, w = x.shape
    c_out, _, kh, kw = weight.shape
    ho, wo = h - kh + 1, w - kw + 1
    hp, wp = ho // 2, wo // 2

    weight = weight.astype(f32)
    bias = bias.astype(f32)

    # Banded conv-weight matrix T: T[(ci*KH+ky)*W + w', co*WO + w] = weight[co,ci,ky,w'-w]
    # whenever 0 <= w'-w < KW, else 0.
    kx = jnp.arange(w)[:, None] - jnp.arange(wo)[None, :]            # (W, WO)
    valid = (kx >= 0) & (kx < kw)
    t = weight[:, :, :, jnp.clip(kx, 0, kw - 1)]                     # (C_OUT, C_IN, KH, W, WO)
    t = jnp.where(valid[None, None, None], t, 0.0)
    t = jnp.transpose(t, (1, 2, 3, 0, 4)).reshape(c_in * kh * w, c_out * wo)

    # Bias as a single lane-dense row (added once to the conv slab).
    b_row = jnp.repeat(bias, wo)[None, :]                            # (1, C_OUT*WO)

    # Dropout2d: per-(sample, channel) scale, expanded to the output slab layout.
    # TODO(synk): torch's RNG stream is not reproducible in JAX; training mode uses jax.random.
    if training:
        keep = jax.random.bernoulli(drop_key, 1.0 - p, (n, c_out)).astype(f32)
        drop = keep / (1.0 - p)
    else:
        drop = jnp.ones((n, c_out), f32)
    drop_mat = jnp.kron(drop, jnp.ones((hp, wp), f32))               # (N*HP, C_OUT*WP)

    # Block-diagonal 2x2 average-pool matrices (0.5 pairs; 0.5*0.5 = 0.25 per window element).
    rows = jnp.arange(n * hp)
    c0 = (rows // hp) * ho + 2 * (rows % hp)
    plm = (jnp.zeros((n * hp, n * ho), f32)
           .at[rows, c0].set(0.5).at[rows, c0 + 1].set(0.5))          # (N*HP, N*HO)
    cols = jnp.arange(c_out * wp)
    r0 = (cols // wp) * wo + 2 * (cols % wp)
    prm = (jnp.zeros((c_out * wo, c_out * wp), f32)
           .at[r0, cols].set(0.5).at[r0 + 1, cols].set(0.5))          # (C_OUT*WO, C_OUT*WP)

    kernel = _make_conv_block_kernel(n, c_in, c_out, h, w, kh, kw)
    vmem = pl.BlockSpec(memory_space=pltpu.MemorySpace.VMEM)

    out2d = pl.pallas_call(
        kernel,
        out_shape=jax.ShapeDtypeStruct((n * hp, c_out * wp), x.dtype),
        in_specs=[vmem] * 6,
        out_specs=vmem,
        scratch_shapes=[pltpu.VMEM((n * ho, c_in * kh * w), jnp.float32)],
    )(t, b_row, drop_mat, plm, prm, x)

    # Layout plumbing back to NCHW: (N*HP, C_OUT*WP) -> (N, C_OUT, HP, WP).
    return out2d.reshape(n, hp, c_out, wp).transpose(0, 2, 1, 3)


def reference_forward(x, weight, bias):
    """Pure-JAX reference of the eval-mode forward (conv -> relu -> avgpool2)."""
    y = jax.lax.conv_general_dilated(
        x, weight, window_strides=(1, 1), padding="VALID",
        dimension_numbers=("NCHW", "OIHW", "NCHW"))
    y = y + bias[None, :, None, None]
    y = jnp.maximum(y, 0.0)
    nn, c, hh, ww = y.shape
    y = y[:, :, : 2 * (hh // 2), : 2 * (ww // 2)]
    return y.reshape(nn, c, hh // 2, 2, ww // 2, 2).mean(axis=(3, 5))


if __name__ == "__main__":
    key = jax.random.PRNGKey(0)
    k_x, k_w, k_b, k_d = jax.random.split(key, 4)

    x = jax.random.normal(k_x, (N, C_IN, H, W), jnp.float32)
    weight = jax.random.normal(k_w, (C_OUT, C_IN, KH, KW), jnp.float32) * 0.1
    bias = jax.random.normal(k_b, (C_OUT,), jnp.float32) * 0.1

    # eval-mode forward (Dropout2d == identity) -> deterministic, checkable
    out = conv_block_forward(x, weight, bias, k_d, training=False)
    out = jax.block_until_ready(out)

    ref = reference_forward(x, weight, bias)
    assert out.shape == ref.shape, (out.shape, ref.shape)
    max_err = float(jnp.max(jnp.abs(out - ref)))
    assert jnp.allclose(out, ref, atol=2e-4, rtol=2e-4), max_err

    print("KERNEL_OK")
</pallas_src>

<mosaic_0001>
module attributes {stable_mosaic.version = 11 : i64} {
  func.func @kernel(%arg0: memref<192x112xf32, #tpu.memory_space<vmem>>, %arg1: memref<1x112xf32, #tpu.memory_space<vmem>>, %arg2: memref<14x56xf32, #tpu.memory_space<vmem>>, %arg3: memref<14x28xf32, #tpu.memory_space<vmem>>, %arg4: memref<112x56xf32, #tpu.memory_space<vmem>>, %arg5: memref<2x4x16x16xf32, #tpu.memory_space<vmem>>, %arg6: memref<14x56xf32, #tpu.memory_space<vmem>>, %arg7: memref<28x192xf32, #tpu.memory_space<vmem>>) attributes {dimension_semantics = [], scalar_prefetch = 0 : i64, scratch_operands = 1 : i64, tpu.core_type = #tpu.core_type<tc>} {
    %c0 = arith.constant 0 : index
    %c0_0 = arith.constant 0 : index
    %c0_1 = arith.constant 0 : index
    %c0_2 = arith.constant 0 : index
    %0 = vector.load %arg5[%c0, %c0_0, %c0_1, %c0_2] : memref<2x4x16x16xf32, #tpu.memory_space<vmem>>, vector<1x1x14x16xf32>
    %1 = vector.shape_cast %0 : vector<1x1x14x16xf32> to vector<14x16xf32>
    %c0_3 = arith.constant 0 : index
    %c0_4 = arith.constant 0 : index
    %2 = vector.load %arg7[%c0_3, %c0_4] : memref<28x192xf32, #tpu.memory_space<vmem>>, vector<14x16xf32>
    tpu.vector_store %arg7[%c0_3, %c0_4], %1 {strides = array<i32>} : memref<28x192xf32, #tpu.memory_space<vmem>>, vector<14x16xf32>,
    %c0_5 = arith.constant 0 : index
    %c0_6 = arith.constant 0 : index
    %c1 = arith.constant 1 : index
    %c0_7 = arith.constant 0 : index
    %3 = vector.load %arg5[%c0_5, %c0_6, %c1, %c0_7] : memref<2x4x16x16xf32, #tpu.memory_space<vmem>>, vector<1x1x14x16xf32>
    %4 = vector.shape_cast %3 : vector<1x1x14x16xf32> to vector<14x16xf32>
    %c0_8 = arith.constant 0 : index
    %c16 = arith.constant 16 : index
    %5 = vector.load %arg7[%c0_8, %c16] : memref<28x192xf32, #tpu.memory_space<vmem>>, vector<14x16xf32>
    tpu.vector_store %arg7[%c0_8, %c16], %4 {strides = array<i32>} : memref<28x192xf32, #tpu.memory_space<vmem>>, vector<14x16xf32>,
    %c0_9 = arith.constant 0 : index
    %c0_10 = arith.constant 0 : index
    %c2 = arith.constant 2 : index
    %c0_11 = arith.constant 0 : index
    %6 = vector.load %arg5[%c0_9, %c0_10, %c2, %c0_11] : memref<2x4x16x16xf32, #tpu.memory_space<vmem>>, vector<1x1x14x16xf32>
    %7 = vector.shape_cast %6 : vector<1x1x14x16xf32> to vector<14x16xf32>
    %c0_12 = arith.constant 0 : index
    %c32 = arith.constant 32 : index
    %8 = vector.load %arg7[%c0_12, %c32] : memref<28x192xf32, #tpu.memory_space<vmem>>, vector<14x16xf32>
    tpu.vector_store %arg7[%c0_12, %c32], %7 {strides = array<i32>} : memref<28x192xf32, #tpu.memory_space<vmem>>, vector<14x16xf32>,
    %c0_13 = arith.constant 0 : index
    %c1_14 = arith.constant 1 : index
    %c0_15 = arith.constant 0 : index
    %c0_16 = arith.constant 0 : index
    %9 = vector.load %arg5[%c0_13, %c1_14, %c0_15, %c0_16] : memref<2x4x16x16xf32, #tpu.memory_space<vmem>>, vector<1x1x14x16xf32>
    %10 = vector.shape_cast %9 : vector<1x1x14x16xf32> to vector<14x16xf32>
    %c0_17 = arith.constant 0 : index
    %c48 = arith.constant 48 : index
    %11 = vector.load %arg7[%c0_17, %c48] : memref<28x192xf32, #tpu.memory_space<vmem>>, vector<14x16xf32>
    tpu.vector_store %arg7[%c0_17, %c48], %10 {strides = array<i32>} : memref<28x192xf32, #tpu.memory_space<vmem>>, vector<14x16xf32>,
    %c0_18 = arith.constant 0 : index
    %c1_19 = arith.constant 1 : index
    %c1_20 = arith.constant 1 : index
    %c0_21 = arith.constant 0 : index
    %12 = vector.load %arg5[%c0_18, %c1_19, %c1_20, %c0_21] : memref<2x4x16x16xf32, #tpu.memory_space<vmem>>, vector<1x1x14x16xf32>
    %13 = vector.shape_cast %12 : vector<1x1x14x16xf32> to vector<14x16xf32>
    %c0_22 = arith.constant 0 : index
    %c64 = arith.constant 64 : index
    %14 = vector.load %arg7[%c0_22, %c64] : memref<28x192xf32, #tpu.memory_space<vmem>>, vector<14x16xf32>
    tpu.vector_store %arg7[%c0_22, %c64], %13 {strides = array<i32>} : memref<28x192xf32, #tpu.memory_space<vmem>>, vector<14x16xf32>,
    %c0_23 = arith.constant 0 : index
    %c1_24 = arith.constant 1 : index
    %c2_25 = arith.constant 2 : index
    %c0_26 = arith.constant 0 : index
    %15 = vector.load %arg5[%c0_23, %c1_24, %c2_25, %c0_26] : memref<2x4x16x16xf32, #tpu.memory_space<vmem>>, vector<1x1x14x16xf32>
    %16 = vector.shape_cast %15 : vector<1x1x14x16xf32> to vector<14x16xf32>
    %c0_27 = arith.constant 0 : index
    %c80 = arith.constant 80 : index
    %17 = vector.load %arg7[%c0_27, %c80] : memref<28x192xf32, #tpu.memory_space<vmem>>, vector<14x16xf32>
    tpu.vector_store %arg7[%c0_27, %c80], %16 {strides = array<i32>} : memref<28x192xf32, #tpu.memory_space<vmem>>, vector<14x16xf32>,
    %c0_28 = arith.constant 0 : index
    %c2_29 = arith.constant 2 : index
    %c0_30 = arith.constant 0 : index
    %c0_31 = arith.constant 0 : index
    %18 = vector.load %arg5[%c0_28, %c2_29, %c0_30, %c0_31] : memref<2x4x16x16xf32, #tpu.memory_space<vmem>>, vector<1x1x14x16xf32>
    %19 = vector.shape_cast %18 : vector<1x1x14x16xf32> to vector<14x16xf32>
    %c0_32 = arith.constant 0 : index
    %c96 = arith.constant 96 : index
    %20 = vector.load %arg7[%c0_32, %c96] : memref<28x192xf32, #tpu.memory_space<vmem>>, vector<14x16xf32>
    tpu.vector_store %arg7[%c0_32, %c96], %19 {strides = array<i32>} : memref<28x192xf32, #tpu.memory_space<vmem>>, vector<14x16xf32>,
    %c0_33 = arith.constant 0 : index
    %c2_34 = arith.constant 2 : index
    %c1_35 = arith.constant 1 : index
    %c0_36 = arith.constant 0 : index
    %21 = vector.load %arg5[%c0_33, %c2_34, %c1_35, %c0_36] : memref<2x4x16x16xf32, #tpu.memory_space<vmem>>, vector<1x1x14x16xf32>
    %22 = vector.shape_cast %21 : vector<1x1x14x16xf32> to vector<14x16xf32>
    %c0_37 = arith.constant 0 : index
    %c112 = arith.constant 112 : index
    %23 = vector.load %arg7[%c0_37, %c112] : memref<28x192xf32, #tpu.memory_space<vmem>>, vector<14x16xf32>
    tpu.vector_store %arg7[%c0_37, %c112], %22 {strides = array<i32>} : memref<28x192xf32, #tpu.memory_space<vmem>>, vector<14x16xf32>,
    %c0_38 = arith.constant 0 : index
    %c2_39 = arith.constant 2 : index
    %c2_40 = arith.constant 2 : index
    %c0_41 = arith.constant 0 : index
    %24 = vector.load %arg5[%c0_38, %c2_39, %c2_40, %c0_41] : memref<2x4x16x16xf32, #tpu.memory_space<vmem>>, vector<1x1x14x16xf32>
    %25 = vector.shape_cast %24 : vector<1x1x14x16xf32> to vector<14x16xf32>
    %c0_42 = arith.constant 0 : index
    %c128 = arith.constant 128 : index
    %26 = vector.load %arg7[%c0_42, %c128] : memref<28x192xf32, #tpu.memory_space<vmem>>, vector<14x16xf32>
    tpu.vector_store %arg7[%c0_42, %c128], %25 {strides = array<i32>} : memref<28x192xf32, #tpu.memory_space<vmem>>, vector<14x16xf32>,
    %c0_43 = arith.constant 0 : index
    %c3 = arith.constant 3 : index
    %c0_44 = arith.constant 0 : index
    %c0_45 = arith.constant 0 : index
    %27 = vector.load %arg5[%c0_43, %c3, %c0_44, %c0_45] : memref<2x4x16x16xf32, #tpu.memory_space<vmem>>, vector<1x1x14x16xf32>
    %28 = vector.shape_cast %27 : vector<1x1x14x16xf32> to vector<14x16xf32>
    %c0_46 = arith.constant 0 : index
    %c144 = arith.constant 144 : index
    %29 = vector.load %arg7[%c0_46, %c144] : memref<28x192xf32, #tpu.memory_space<vmem>>, vector<14x16xf32>
    tpu.vector_store %arg7[%c0_46, %c144], %28 {strides = array<i32>} : memref<28x192xf32, #tpu.memory_space<vmem>>, vector<14x16xf32>,
    %c0_47 = arith.constant 0 : index
    %c3_48 = arith.constant 3 : index
    %c1_49 = arith.constant 1 : index
    %c0_50 = arith.constant 0 : index
    %30 = vector.load %arg5[%c0_47, %c3_48, %c1_49, %c0_50] : memref<2x4x16x16xf32, #tpu.memory_space<vmem>>, vector<1x1x14x16xf32>
    %31 = vector.shape_cast %30 : vector<1x1x14x16xf32> to vector<14x16xf32>
    %c0_51 = arith.constant 0 : index
    %c160 = arith.constant 160 : index
    %32 = vector.load %arg7[%c0_51, %c160] : memref<28x192xf32, #tpu.memory_space<vmem>>, vector<14x16xf32>
    tpu.vector_store %arg7[%c0_51, %c160], %31 {strides = array<i32>} : memref<28x192xf32, #tpu.memory_space<vmem>>, vector<14x16xf32>,
    %c0_52 = arith.constant 0 : index
    %c3_53 = arith.constant 3 : index
    %c2_54 = arith.constant 2 : index
    %c0_55 = arith.constant 0 : index
    %33 = vector.load %arg5[%c0_52, %c3_53, %c2_54, %c0_55] : memref<2x4x16x16xf32, #tpu.memory_space<vmem>>, vector<1x1x14x16xf32>
    %34 = vector.shape_cast %33 : vector<1x1x14x16xf32> to vector<14x16xf32>
    %c0_56 = arith.constant 0 : index
    %c176 = arith.constant 176 : index
    %35 = vector.load %arg7[%c0_56, %c176] : memref<28x192xf32, #tpu.memory_space<vmem>>, vector<14x16xf32>
    tpu.vector_store %arg7[%c0_56, %c176], %34 {strides = array<i32>} : memref<28x192xf32, #tpu.memory_space<vmem>>, vector<14x16xf32>,
    %c1_57 = arith.constant 1 : index
    %c0_58 = arith.constant 0 : index
    %c0_59 = arith.constant 0 : index
    %c0_60 = arith.constant 0 : index
    %36 = vector.load %arg5[%c1_57, %c0_58, %c0_59, %c0_60] : memref<2x4x16x16xf32, #tpu.memory_space<vmem>>, vector<1x1x14x16xf32>
    %37 = vector.shape_cast %36 : vector<1x1x14x16xf32> to vector<14x16xf32>
    %c14 = arith.constant 14 : index
    %c0_61 = arith.constant 0 : index
    %38 = vector.load %arg7[%c14, %c0_61] : memref<28x192xf32, #tpu.memory_space<vmem>>, vector<14x16xf32>
    tpu.vector_store %arg7[%c14, %c0_61], %37 {strides = array<i32>} : memref<28x192xf32, #tpu.memory_space<vmem>>, vector<14x16xf32>,
    %c1_62 = arith.constant 1 : index
    %c0_63 = arith.constant 0 : index
    %c1_64 = arith.constant 1 : index
    %c0_65 = arith.constant 0 : index
    %39 = vector.load %arg5[%c1_62, %c0_63, %c1_64, %c0_65] : memref<2x4x16x16xf32, #tpu.memory_space<vmem>>, vector<1x1x14x16xf32>
    %40 = vector.shape_cast %39 : vector<1x1x14x16xf32> to vector<14x16xf32>
    %c14_66 = arith.constant 14 : index
    %c16_67 = arith.constant 16 : index
    %41 = vector.load %arg7[%c14_66, %c16_67] : memref<28x192xf32, #tpu.memory_space<vmem>>, vector<14x16xf32>
    tpu.vector_store %arg7[%c14_66, %c16_67], %40 {strides = array<i32>} : memref<28x192xf32, #tpu.memory_space<vmem>>, vector<14x16xf32>,
    %c1_68 = arith.constant 1 : index
    %c0_69 = arith.constant 0 : index
    %c2_70 = arith.constant 2 : index
    %c0_71 = arith.constant 0 : index
    %42 = vector.load %arg5[%c1_68, %c0_69, %c2_70, %c0_71] : memref<2x4x16x16xf32, #tpu.memory_space<vmem>>, vector<1x1x14x16xf32>
    %43 = vector.shape_cast %42 : vector<1x1x14x16xf32> to vector<14x16xf32>
    %c14_72 = arith.constant 14 : index
    %c32_73 = arith.constant 32 : index
    %44 = vector.load %arg7[%c14_72, %c32_73] : memref<28x192xf32, #tpu.memory_space<vmem>>, vector<14x16xf32>
    tpu.vector_store %arg7[%c14_72, %c32_73], %43 {strides = array<i32>} : memref<28x192xf32, #tpu.memory_space<vmem>>, vector<14x16xf32>,
    %c1_74 = arith.constant 1 : index
    %c1_75 = arith.constant 1 : index
    %c0_76 = arith.constant 0 : index
    %c0_77 = arith.constant 0 : index
    %45 = vector.load %arg5[%c1_74, %c1_75, %c0_76, %c0_77] : memref<2x4x16x16xf32, #tpu.memory_space<vmem>>, vector<1x1x14x16xf32>
    %46 = vector.shape_cast %45 : vector<1x1x14x16xf32> to vector<14x16xf32>
    %c14_78 = arith.constant 14 : index
    %c48_79 = arith.constant 48 : index
    %47 = vector.load %arg7[%c14_78, %c48_79] : memref<28x192xf32, #tpu.memory_space<vmem>>, vector<14x16xf32>
    tpu.vector_store %arg7[%c14_78, %c48_79], %46 {strides = array<i32>} : memref<28x192xf32, #tpu.memory_space<vmem>>, vector<14x16xf32>,
    %c1_80 = arith.constant 1 : index
    %c1_81 = arith.constant 1 : index
    %c1_82 = arith.constant 1 : index
    %c0_83 = arith.constant 0 : index
    %48 = vector.load %arg5[%c1_80, %c1_81, %c1_82, %c0_83] : memref<2x4x16x16xf32, #tpu.memory_space<vmem>>, vector<1x1x14x16xf32>
    %49 = vector.shape_cast %48 : vector<1x1x14x16xf32> to vector<14x16xf32>
    %c14_84 = arith.constant 14 : index
    %c64_85 = arith.constant 64 : index
    %50 = vector.load %arg7[%c14_84, %c64_85] : memref<28x192xf32, #tpu.memory_space<vmem>>, vector<14x16xf32>
    tpu.vector_store %arg7[%c14_84, %c64_85], %49 {strides = array<i32>} : memref<28x192xf32, #tpu.memory_space<vmem>>, vector<14x16xf32>,
    %c1_86 = arith.constant 1 : index
    %c1_87 = arith.constant 1 : index
    %c2_88 = arith.constant 2 : index
    %c0_89 = arith.constant 0 : index
    %51 = vector.load %arg5[%c1_86, %c1_87, %c2_88, %c0_89] : memref<2x4x16x16xf32, #tpu.memory_space<vmem>>, vector<1x1x14x16xf32>
    %52 = vector.shape_cast %51 : vector<1x1x14x16xf32> to vector<14x16xf32>
    %c14_90 = arith.constant 14 : index
    %c80_91 = arith.constant 80 : index
    %53 = vector.load %arg7[%c14_90, %c80_91] : memref<28x192xf32, #tpu.memory_space<vmem>>, vector<14x16xf32>
    tpu.vector_store %arg7[%c14_90, %c80_91], %52 {strides = array<i32>} : memref<28x192xf32, #tpu.memory_space<vmem>>, vector<14x16xf32>,
    %c1_92 = arith.constant 1 : index
    %c2_93 = arith.constant 2 : index
    %c0_94 = arith.constant 0 : index
    %c0_95 = arith.constant 0 : index
    %54 = vector.load %arg5[%c1_92, %c2_93, %c0_94, %c0_95] : memref<2x4x16x16xf32, #tpu.memory_space<vmem>>, vector<1x1x14x16xf32>
    %55 = vector.shape_cast %54 : vector<1x1x14x16xf32> to vector<14x16xf32>
    %c14_96 = arith.constant 14 : index
    %c96_97 = arith.constant 96 : index
    %56 = vector.load %arg7[%c14_96, %c96_97] : memref<28x192xf32, #tpu.memory_space<vmem>>, vector<14x16xf32>
    tpu.vector_store %arg7[%c14_96, %c96_97], %55 {strides = array<i32>} : memref<28x192xf32, #tpu.memory_space<vmem>>, vector<14x16xf32>,
    %c1_98 = arith.constant 1 : index
    %c2_99 = arith.constant 2 : index
    %c1_100 = arith.constant 1 : index
    %c0_101 = arith.constant 0 : index
    %57 = vector.load %arg5[%c1_98, %c2_99, %c1_100, %c0_101] : memref<2x4x16x16xf32, #tpu.memory_space<vmem>>, vector<1x1x14x16xf32>
    %58 = vector.shape_cast %57 : vector<1x1x14x16xf32> to vector<14x16xf32>
    %c14_102 = arith.constant 14 : index
    %c112_103 = arith.constant 112 : index
    %59 = vector.load %arg7[%c14_102, %c112_103] : memref<28x192xf32, #tpu.memory_space<vmem>>, vector<14x16xf32>
    tpu.vector_store %arg7[%c14_102, %c112_103], %58 {strides = array<i32>} : memref<28x192xf32, #tpu.memory_space<vmem>>, vector<14x16xf32>,
    %c1_104 = arith.constant 1 : index
    %c2_105 = arith.constant 2 : index
    %c2_106 = arith.constant 2 : index
    %c0_107 = arith.constant 0 : index
    %60 = vector.load %arg5[%c1_104, %c2_105, %c2_106, %c0_107] : memref<2x4x16x16xf32, #tpu.memory_space<vmem>>, vector<1x1x14x16xf32>
    %61 = vector.shape_cast %60 : vector<1x1x14x16xf32> to vector<14x16xf32>
    %c14_108 = arith.constant 14 : index
    %c128_109 = arith.constant 128 : index
    %62 = vector.load %arg7[%c14_108, %c128_109] : memref<28x192xf32, #tpu.memory_space<vmem>>, vector<14x16xf32>
    tpu.vector_store %arg7[%c14_108, %c128_109], %61 {strides = array<i32>} : memref<28x192xf32, #tpu.memory_space<vmem>>, vector<14x16xf32>,
    %c1_110 = arith.constant 1 : index
    %c3_111 = arith.constant 3 : index
    %c0_112 = arith.constant 0 : index
    %c0_113 = arith.constant 0 : index
    %63 = vector.load %arg5[%c1_110, %c3_111, %c0_112, %c0_113] : memref<2x4x16x16xf32, #tpu.memory_space<vmem>>, vector<1x1x14x16xf32>
    %64 = vector.shape_cast %63 : vector<1x1x14x16xf32> to vector<14x16xf32>
    %c14_114 = arith.constant 14 : index
    %c144_115 = arith.constant 144 : index
    %65 = vector.load %arg7[%c14_114, %c144_115] : memref<28x192xf32, #tpu.memory_space<vmem>>, vector<14x16xf32>
    tpu.vector_store %arg7[%c14_114, %c144_115], %64 {strides = array<i32>} : memref<28x192xf32, #tpu.memory_space<vmem>>, vector<14x16xf32>,
    %c1_116 = arith.constant 1 : index
    %c3_117 = arith.constant 3 : index
    %c1_118 = arith.constant 1 : index
    %c0_119 = arith.constant 0 : index
    %66 = vector.load %arg5[%c1_116, %c3_117, %c1_118, %c0_119] : memref<2x4x16x16xf32, #tpu.memory_space<vmem>>, vector<1x1x14x16xf32>
    %67 = vector.shape_cast %66 : vector<1x1x14x16xf32> to vector<14x16xf32>
    %c14_120 = arith.constant 14 : index
    %c160_121 = arith.constant 160 : index
    %68 = vector.load %arg7[%c14_120, %c160_121] : memref<28x192xf32, #tpu.memory_space<vmem>>, vector<14x16xf32>
    tpu.vector_store %arg7[%c14_120, %c160_121], %67 {strides = array<i32>} : memref<28x192xf32, #tpu.memory_space<vmem>>, vector<14x16xf32>,
    %c1_122 = arith.constant 1 : index
    %c3_123 = arith.constant 3 : index
    %c2_124 = arith.constant 2 : index
    %c0_125 = arith.constant 0 : index
    %69 = vector.load %arg5[%c1_122, %c3_123, %c2_124, %c0_125] : memref<2x4x16x16xf32, #tpu.memory_space<vmem>>, vector<1x1x14x16xf32>
    %70 = vector.shape_cast %69 : vector<1x1x14x16xf32> to vector<14x16xf32>
    %c14_126 = arith.constant 14 : index
    %c176_127 = arith.constant 176 : index
    %71 = vector.load %arg7[%c14_126, %c176_127] : memref<28x192xf32, #tpu.memory_space<vmem>>, vector<14x16xf32>
    tpu.vector_store %arg7[%c14_126, %c176_127], %70 {strides = array<i32>} : memref<28x192xf32, #tpu.memory_space<vmem>>, vector<14x16xf32>,
    %c0_128 = arith.constant 0 : index
    %c0_129 = arith.constant 0 : index
    %72 = vector.load %arg7[%c0_128, %c0_129] : memref<28x192xf32, #tpu.memory_space<vmem>>, vector<28x192xf32>
    %c0_130 = arith.constant 0 : index
    %c0_131 = arith.constant 0 : index
    %73 = vector.load %arg0[%c0_130, %c0_131] : memref<192x112xf32, #tpu.memory_space<vmem>>, vector<192x112xf32>
    %cst = arith.constant dense<0.000000e+00> : vector<28x112xf32>
    %74 = tpu.matmul %72, %73, %cst {dimension_numbers = #tpu.dot_dimension_numbers<[1], [0], [0], [1], [0, 0, 1, 1], [], []>} : vector<28x192xf32>, vector<192x112xf32>, vector<28x112xf32> -> vector<28x112xf32>
    %c0_132 = arith.constant 0 : index
    %c0_133 = arith.constant 0 : index
    %75 = vector.load %arg1[%c0_132, %c0_133] : memref<1x112xf32, #tpu.memory_space<vmem>>, vector<1x112xf32>
    %76 = vector.broadcast %75 : vector<1x112xf32> to vector<28x112xf32>
    %77 = arith.addf %74, %76 : vector<28x112xf32>
    %cst_134 = arith.constant 0.000000e+00 : f32
    %78 = vector.broadcast %cst_134 : f32 to vector<28x112xf32>
    %79 = arith.maximumf %77, %78 : vector<28x112xf32>
    %c0_135 = arith.constant 0 : index
    %c0_136 = arith.constant 0 : index
    %80 = vector.load %arg3[%c0_135, %c0_136] : memref<14x28xf32, #tpu.memory_space<vmem>>, vector<14x28xf32>
    %cst_137 = arith.constant dense<0.000000e+00> : vector<14x112xf32>
    %81 = tpu.matmul %80, %79, %cst_137 {dimension_numbers = #tpu.dot_dimension_numbers<[1], [0], [0], [1], [0, 0, 1, 1], [], []>} : vector<14x28xf32>, vector<28x112xf32>, vector<14x112xf32> -> vector<14x112xf32>
    %c0_138 = arith.constant 0 : index
    %c0_139 = arith.constant 0 : index
    %82 = vector.load %arg4[%c0_138, %c0_139] : memref<112x56xf32, #tpu.memory_space<vmem>>, vector<112x56xf32>
    %cst_140 = arith.constant dense<0.000000e+00> : vector<14x56xf32>
    %83 = tpu.matmul %81, %82, %cst_140 {dimension_numbers = #tpu.dot_dimension_numbers<[1], [0], [0], [1], [0, 0, 1, 1], [], []>} : vector<14x112xf32>, vector<112x56xf32>, vector<14x56xf32> -> vector<14x56xf32>
    %c0_141 = arith.constant 0 : index
    %c0_142 = arith.constant 0 : index
    %84 = vector.load %arg2[%c0_141, %c0_142] : memref<14x56xf32, #tpu.memory_space<vmem>>, vector<14x56xf32>
    %85 = arith.mulf %83, %84 : vector<14x56xf32>
    %c0_143 = arith.constant 0 : index
    %c0_144 = arith.constant 0 : index
    %86 = vector.load %arg6[%c0_143, %c0_144] : memref<14x56xf32, #tpu.memory_space<vmem>>, vector<14x56xf32>
    tpu.vector_store %arg6[%c0_143, %c0_144], %85 {strides = array<i32>} : memref<14x56xf32, #tpu.memory_space<vmem>>, vector<14x56xf32>,
    return
  }
}

</mosaic_0001>

<llo_original>
// kernel: conv_block_forward.1
$region0: #{conv_block_forward.1}
  #allocation0 [shape = 'u32[]', space=smem, size = 0x4, offset = 0x4, fixed_abs, tag = 'smem constant byte address 0x4 - core index']
  #allocation1 [shape = 'u32[144,128]{1,0:T(1,128)}', space=vmem, size = 0x12000, scoped, tag = 'internal scratch']
  #allocation2 [shape = 'f32[28,192]{1,0:T(8,128)}', space=vmem, size = 0x8000, scoped, tag = 'scratch operand']
  %s0 = inlined_call_operand.vmem [shape: f32[192,112], index: 0, kind: input, shape index: {}]
  %s1 = inlined_call_operand.vmem [shape: f32[1,112], index: 1, kind: input, shape index: {}]
  %s2 = inlined_call_operand.vmem [shape: f32[14,56], index: 2, kind: input, shape index: {}]
  %s3 = inlined_call_operand.vmem [shape: f32[14,28], index: 3, kind: input, shape index: {}]
  %s4 = inlined_call_operand.vmem [shape: f32[112,56], index: 4, kind: input, shape index: {}]
  %s5 = inlined_call_operand.vmem [shape: f32[2,4,16,16], index: 5, kind: input, shape index: {}]
  %s6 = inlined_call_operand.vmem [shape: f32[14,56], index: 6, kind: output, shape index: {}]
  %s7 = sld [smem:[#allocation0]]
  $region34: #{conv_block_forward.1} parent=0
    _
  %s9 = ssub.s32 1, %s7
  %s10 = scalar_select 0, %s9, %s7
  // Predicated region
  $region2: #{conv_block_forward.1} parent=0 // pred_check
    _
  $region3: #{conv_block_forward.1} parent=0 // pred_check_branch
    %12 = sbr.rel (0) target = $region5
  $region4: #{conv_block_forward.1} parent=0 // pred_region
    _
  $region5: #{conv_block_forward.1} parent=0 // pred_fallthru
    _
  // Predicated region
  $region6: #{conv_block_forward.1} parent=0 // pred_check
    _
  $region7: #{conv_block_forward.1} parent=0 // pred_check_branch
    %14 = sbr.rel (0) target = $region9
  $region8: #{conv_block_forward.1} parent=0 // pred_region
    _
  $region9: #{conv_block_forward.1} parent=0 // pred_fallthru
    _
  // Predicated region
  $region10: #{conv_block_forward.1} parent=0 // pred_check
    _
  $region11: #{conv_block_forward.1} parent=0 // pred_check_branch
    %16 = sbr.rel (0) target = $region13
  $region12: #{conv_block_forward.1} parent=0 // pred_region
    _
  $region13: #{conv_block_forward.1} parent=0 // pred_fallthru
    _
  // Predicated region
  $region14: #{conv_block_forward.1} parent=0 // pred_check
    _
  $region15: #{conv_block_forward.1} parent=0 // pred_check_branch
    %18 = sbr.rel (0) target = $region17
  $region16: #{conv_block_forward.1} parent=0 // pred_region
    _
  $region17: #{conv_block_forward.1} parent=0 // pred_fallthru
    _
  // Predicated region
  $region18: #{conv_block_forward.1} parent=0 // pred_check
    _
  $region19: #{conv_block_forward.1} parent=0 // pred_check_branch
    %20 = sbr.rel (0) target = $region21
  $region20: #{conv_block_forward.1} parent=0 // pred_region
    _
  $region21: #{conv_block_forward.1} parent=0 // pred_fallthru
    _
  // Predicated region
  $region22: #{conv_block_forward.1} parent=0 // pred_check
    _
  $region23: #{conv_block_forward.1} parent=0 // pred_check_branch
    %22 = sbr.rel (0) target = $region25
  $region24: #{conv_block_forward.1} parent=0 // pred_region
    _
  $region25: #{conv_block_forward.1} parent=0 // pred_fallthru
    _
  %v23 = vld [vmem:[%s5] sm:$0xff]
  %v24 = vld [vmem:[%s5 + $0x8] sm:$0x3f]
  %vm25 = vcmask 130048
  %26 = vst.msk [vmem:[#allocation2] sm:$0xff] %vm25, %v23
  %vm27 = vcmask 128000
  %28 = vst.msk [vmem:[#allocation2 + $0x10] sm:$0x3f] %vm27, %v24
  %v29 = vld [vmem:[%s5 + $0x1] sm:$0xff]
  %v30 = vld [vmem:[%s5 + $0x9] sm:$0x3f]
  %33 = vrot.lane.b32.xlu0 %v29, 16
  %v34 = vpop.permute.xlu0 %33
  %35 = vrot.lane.b32.xlu0 %v30, 16
  %v36 = vpop.permute.xlu0 %35
  %vm39 = vcmask 261248
  %40 = vst.msk [vmem:[#allocation2] sm:$0xff] %vm39, %v34
  %vm41 = vcmask 259200
  %42 = vst.msk [vmem:[#allocation2 + $0x10] sm:$0x3f] %vm41, %v36
  %v43 = vld [vmem:[%s5 + $0x2] sm:$0xff]
  %v44 = vld [vmem:[%s5 + $0xa] sm:$0x3f]
  %47 = vrot.lane.b32.xlu0 %v43, 32
  %v48 = vpop.permute.xlu0 %47
  %49 = vrot.lane.b32.xlu0 %v44, 32
  %v50 = vpop.permute.xlu0 %49
  %vm53 = vcmask 392448
  %54 = vst.msk [vmem:[#allocation2] sm:$0xff] %vm53, %v48
  %vm55 = vcmask 390400
  %56 = vst.msk [vmem:[#allocation2 + $0x10] sm:$0x3f] %vm55, %v50
  %s57 = scalar_lea.vmem %s5, 16
  %v58 = vld [vmem:[%s57] sm:$0xff]
  %v59 = vld [vmem:[%s57 + $0x8] sm:$0x3f]
  %62 = vrot.lane.b32.xlu0 %v58, 48
  %v63 = vpop.permute.xlu0 %62
  %64 = vrot.lane.b32.xlu0 %v59, 48
  %v65 = vpop.permute.xlu0 %64
  %vm68 = vcmask 523648
  %69 = vst.msk [vmem:[#allocation2] sm:$0xff] %vm68, %v63
  %vm70 = vcmask 521600
  %71 = vst.msk [vmem:[#allocation2 + $0x10] sm:$0x3f] %vm70, %v65
  %v72 = vld [vmem:[%s57 + $0x1] sm:$0xff]
  %v73 = vld [vmem:[%s57 + $0x9] sm:$0x3f]
  %76 = vrot.lane.b32.xlu0 %v72, 64
  %v77 = vpop.permute.xlu0 %76
  %78 = vrot.lane.b32.xlu0 %v73, 64
  %v79 = vpop.permute.xlu0 %78
  %vm82 = vcmask 654848
  %83 = vst.msk [vmem:[#allocation2] sm:$0xff] %vm82, %v77
  %vm84 = vcmask 652800
  %85 = vst.msk [vmem:[#allocation2 + $0x10] sm:$0x3f] %vm84, %v79
  %v86 = vld [vmem:[%s57 + $0x2] sm:$0xff]
  %v87 = vld [vmem:[%s57 + $0xa] sm:$0x3f]
  %90 = vrot.lane.b32.xlu0 %v86, 80
  %v91 = vpop.permute.xlu0 %90
  %92 = vrot.lane.b32.xlu0 %v87, 80
  %v93 = vpop.permute.xlu0 %92
  %vm96 = vcmask 786048
  %97 = vst.msk [vmem:[#allocation2] sm:$0xff] %vm96, %v91
  %vm98 = vcmask 784000
  %99 = vst.msk [vmem:[#allocation2 + $0x10] sm:$0x3f] %vm98, %v93
  %s100 = scalar_lea.vmem %s5, 32
  %v101 = vld [vmem:[%s100] sm:$0xff]
  %v102 = vld [vmem:[%s100 + $0x8] sm:$0x3f]
  %105 = vrot.lane.b32.xlu0 %v101, 96
  %v106 = vpop.permute.xlu0 %105
  %107 = vrot.lane.b32.xlu0 %v102, 96
  %v108 = vpop.permute.xlu0 %107
  %vm111 = vcmask 917248
  %112 = vst.msk [vmem:[#allocation2] sm:$0xff] %vm111, %v106
  %vm113 = vcmask 915200
  %114 = vst.msk [vmem:[#allocation2 + $0x10] sm:$0x3f] %vm113, %v108
  %v115 = vld [vmem:[%s100 + $0x1] sm:$0xff]
  %v116 = vld [vmem:[%s100 + $0x9] sm:$0x3f]
  %119 = vrot.lane.b32.xlu0 %v115, 112
  %v120 = vpop.permute.xlu0 %119
  %121 = vrot.lane.b32.xlu0 %v116, 112
  %v122 = vpop.permute.xlu0 %121
  %vm125 = vcmask 1048448
  %126 = vst.msk [vmem:[#allocation2] sm:$0xff] %vm125, %v120
  %vm127 = vcmask 1046400
  %128 = vst.msk [vmem:[#allocation2 + $0x10] sm:$0x3f] %vm127, %v122
  %v129 = vld [vmem:[%s100 + $0x2] sm:$0xff]
  %v130 = vld [vmem:[%s100 + $0xa] sm:$0x3f]
  %131 = vst.msk [vmem:[#allocation2 + $0x8] sm:$0xff] %vm25, %v129
  %132 = vst.msk [vmem:[#allocation2 + $0x18] sm:$0x3f] %vm27, %v130
  %s133 = scalar_lea.vmem %s5, 48
  %v134 = vld [vmem:[%s133] sm:$0xff]
  %v135 = vld [vmem:[%s133 + $0x8] sm:$0x3f]
  %138 = vrot.lane.b32.xlu0 %v134, 16
  %v139 = vpop.permute.xlu0 %138
  %140 = vrot.lane.b32.xlu0 %v135, 16
  %v141 = vpop.permute.xlu0 %140
  %144 = vst.msk [vmem:[#allocation2 + $0x8] sm:$0xff] %vm39, %v139
  %145 = vst.msk [vmem:[#allocation2 + $0x18] sm:$0x3f] %vm41, %v141
  %v146 = vld [vmem:[%s133 + $0x1] sm:$0xff]
  %v147 = vld [vmem:[%s133 + $0x9] sm:$0x3f]
  %150 = vrot.lane.b32.xlu0 %v146, 32
  %v151 = vpop.permute.xlu0 %150
  %152 = vrot.lane.b32.xlu0 %v147, 32
  %v153 = vpop.permute.xlu0 %152
  %156 = vst.msk [vmem:[#allocation2 + $0x8] sm:$0xff] %vm53, %v151
  %157 = vst.msk [vmem:[#allocation2 + $0x18] sm:$0x3f] %vm55, %v153
  %v158 = vld [vmem:[%s133 + $0x2] sm:$0xff]
  %v159 = vld [vmem:[%s133 + $0xa] sm:$0x3f]
  %162 = vrot.lane.b32.xlu0 %v158, 48
  %v163 = vpop.permute.xlu0 %162
  %164 = vrot.lane.b32.xlu0 %v159, 48
  %v165 = vpop.permute.xlu0 %164
  %168 = vst.msk [vmem:[#allocation2 + $0x8] sm:$0xff] %vm68, %v163
  %169 = vst.msk [vmem:[#allocation2 + $0x18] sm:$0x3f] %vm70, %v165
  %s170 = scalar_lea.vmem %s5, 64
  %v171 = vld [vmem:[%s170] sm:$0xff]
  %v172 = vld [vmem:[%s170 + $0x8] sm:$0x3f]
  %vm175 = vcmask 1045504
  %v176 = vrot.slane %v171, 2
  %v177 = vrot.slane %v172, 2
  %v178 = vsel %vm175, %v176, %v177
  %vm182 = vcmask 130054
  %183 = vst.msk [vmem:[#allocation2 + $0x10] sm:$0xc0] %vm182, %v176
  %184 = vst.msk [vmem:[#allocation2 + $0x20] sm:$0xff] %vm25, %v178
  %vm185 = vcmask 125952
  %186 = vst.msk [vmem:[#allocation2 + $0x30] sm:$0xf] %vm185, %v177
  %v187 = vld [vmem:[%s170 + $0x1] sm:$0xff]
  %v188 = vld [vmem:[%s170 + $0x9] sm:$0x3f]
  %v191 = vrot.slane %v187, 2
  %v192 = vrot.slane %v188, 2
  %v193 = vsel %vm175, %v191, %v192
  %194 = vrot.lane.b32.xlu0 %v191, 16
  %v195 = vpop.permute.xlu0 %194
  %196 = vrot.lane.b32.xlu0 %v193, 16
  %v197 = vpop.permute.xlu0 %196
  %198 = vrot.lane.b32.xlu0 %v192, 16
  %v199 = vpop.permute.xlu0 %198
  %vm203 = vcmask 261254
  %204 = vst.msk [vmem:[#allocation2 + $0x10] sm:$0xc0] %vm203, %v195
  %205 = vst.msk [vmem:[#allocation2 + $0x20] sm:$0xff] %vm39, %v197
  %vm206 = vcmask 257152
  %207 = vst.msk [vmem:[#allocation2 + $0x30] sm:$0xf] %vm206, %v199
  %v208 = vld [vmem:[%s170 + $0x2] sm:$0xff]
  %v209 = vld [vmem:[%s170 + $0xa] sm:$0x3f]
  %v212 = vrot.slane %v208, 2
  %v213 = vrot.slane %v209, 2
  %v214 = vsel %vm175, %v212, %v213
  %215 = vrot.lane.b32.xlu0 %v212, 32
  %v216 = vpop.permute.xlu0 %215
  %217 = vrot.lane.b32.xlu0 %v214, 32
  %v218 = vpop.permute.xlu0 %217
  %219 = vrot.lane.b32.xlu0 %v213, 32
  %v220 = vpop.permute.xlu0 %219
  %vm224 = vcmask 392454
  %225 = vst.msk [vmem:[#allocation2 + $0x10] sm:$0xc0] %vm224, %v216
  %226 = vst.msk [vmem:[#allocation2 + $0x20] sm:$0xff] %vm53, %v218
  %vm227 = vcmask 388352
  %228 = vst.msk [vmem:[#allocation2 + $0x30] sm:$0xf] %vm227, %v220
  %s229 = scalar_lea.vmem %s5, 80
  %v230 = vld [vmem:[%s229] sm:$0xff]
  %v231 = vld [vmem:[%s229 + $0x8] sm:$0x3f]
  %v234 = vrot.slane %v230, 2
  %v235 = vrot.slane %v231, 2
  %v236 = vsel %vm175, %v234, %v235
  %237 = vrot.lane.b32.xlu0 %v234, 48
  %v238 = vpop.permute.xlu0 %237
  %239 = vrot.lane.b32.xlu0 %v236, 48
  %v240 = vpop.permute.xlu0 %239
  %241 = vrot.lane.b32.xlu0 %v235, 48
  %v242 = vpop.permute.xlu0 %241
  %vm246 = vcmask 523654
  %247 = vst.msk [vmem:[#allocation2 + $0x10] sm:$0xc0] %vm246, %v238
  %248 = vst.msk [vmem:[#allocation2 + $0x20] sm:$0xff] %vm68, %v240
  %vm249 = vcmask 519552
  %250 = vst.msk [vmem:[#allocation2 + $0x30] sm:$0xf] %vm249, %v242
  %v251 = vld [vmem:[%s229 + $0x1] sm:$0xff]
  %v252 = vld [vmem:[%s229 + $0x9] sm:$0x3f]
  %v255 = vrot.slane %v251, 2
  %v256 = vrot.slane %v252, 2
  %v257 = vsel %vm175, %v255, %v256
  %258 = vrot.lane.b32.xlu0 %v255, 64
  %v259 = vpop.permute.xlu0 %258
  %260 = vrot.lane.b32.xlu0 %v257, 64
  %v261 = vpop.permute.xlu0 %260
  %262 = vrot.lane.b32.xlu0 %v256, 64
  %v263 = vpop.permute.xlu0 %262
  %vm267 = vcmask 654854
  %268 = vst.msk [vmem:[#allocation2 + $0x10] sm:$0xc0] %vm267, %v259
  %269 = vst.msk [vmem:[#allocation2 + $0x20] sm:$0xff] %vm82, %v261
  %vm270 = vcmask 650752
  %271 = vst.msk [vmem:[#allocation2 + $0x30] sm:$0xf] %vm270, %v263
  %v272 = vld [vmem:[%s229 + $0x2] sm:$0xff]
  %v273 = vld [vmem:[%s229 + $0xa] sm:$0x3f]
  %v276 = vrot.slane %v272, 2
  %v277 = vrot.slane %v273, 2
  %v278 = vsel %vm175, %v276, %v277
  %279 = vrot.lane.b32.xlu0 %v276, 80
  %v280 = vpop.permute.xlu0 %279
  %281 = vrot.lane.b32.xlu0 %v278, 80
  %v282 = vpop.permute.xlu0 %281
  %283 = vrot.lane.b32.xlu0 %v277, 80
  %v284 = vpop.permute.xlu0 %283
  %vm288 = vcmask 786054
  %289 = vst.msk [vmem:[#allocation2 + $0x10] sm:$0xc0] %vm288, %v280
  %290 = vst.msk [vmem:[#allocation2 + $0x20] sm:$0xff] %vm96, %v282
  %vm291 = vcmask 781952
  %292 = vst.msk [vmem:[#allocation2 + $0x30] sm:$0xf] %vm291, %v284
  %s293 = scalar_lea.vmem %s5, 96
  %v294 = vld [vmem:[%s293] sm:$0xff]
  %v295 = vld [vmem:[%s293 + $0x8] sm:$0x3f]
  %v298 = vrot.slane %v294, 2
  %v299 = vrot.slane %v295, 2
  %v300 = vsel %vm175, %v298, %v299
  %301 = vrot.lane.b32.xlu0 %v298, 96
  %v302 = vpop.permute.xlu0 %301
  %303 = vrot.lane.b32.xlu0 %v300, 96
  %v304 = vpop.permute.xlu0 %303
  %305 = vrot.lane.b32.xlu0 %v299, 96
  %v306 = vpop.permute.xlu0 %305
  %vm310 = vcmask 917254
  %311 = vst.msk [vmem:[#allocation2 + $0x10] sm:$0xc0] %vm310, %v302
  %312 = vst.msk [vmem:[#allocation2 + $0x20] sm:$0xff] %vm111, %v304
  %vm313 = vcmask 913152
  %314 = vst.msk [vmem:[#allocation2 + $0x30] sm:$0xf] %vm313, %v306
  %v315 = vld [vmem:[%s293 + $0x1] sm:$0xff]
  %v316 = vld [vmem:[%s293 + $0x9] sm:$0x3f]
  %v319 = vrot.slane %v315, 2
  %v320 = vrot.slane %v316, 2
  %v321 = vsel %vm175, %v319, %v320
  %322 = vrot.lane.b32.xlu0 %v319, 112
  %v323 = vpop.permute.xlu0 %322
  %324 = vrot.lane.b32.xlu0 %v321, 112
  %v325 = vpop.permute.xlu0 %324
  %326 = vrot.lane.b32.xlu0 %v320, 112
  %v327 = vpop.permute.xlu0 %326
  %vm331 = vcmask 1048454
  %332 = vst.msk [vmem:[#allocation2 + $0x10] sm:$0xc0] %vm331, %v323
  %333 = vst.msk [vmem:[#allocation2 + $0x20] sm:$0xff] %vm125, %v325
  %vm334 = vcmask 1044352
  %335 = vst.msk [vmem:[#allocation2 + $0x30] sm:$0xf] %vm334, %v327
  %v336 = vld [vmem:[%s293 + $0x2] sm:$0xff]
  %v337 = vld [vmem:[%s293 + $0xa] sm:$0x3f]
  %v340 = vrot.slane %v336, 2
  %v341 = vrot.slane %v337, 2
  %v342 = vsel %vm175, %v340, %v341
  %346 = vst.msk [vmem:[#allocation2 + $0x18] sm:$0xc0] %vm182, %v340
  %347 = vst.msk [vmem:[#allocation2 + $0x28] sm:$0xff] %vm25, %v342
  %348 = vst.msk [vmem:[#allocation2 + $0x38] sm:$0xf] %vm185, %v341
  %s349 = scalar_lea.vmem %s5, 112
  %v350 = vld [vmem:[%s349] sm:$0xff]
  %v351 = vld [vmem:[%s349 + $0x8] sm:$0x3f]
  %v354 = vrot.slane %v350, 2
  %v355 = vrot.slane %v351, 2
  %v356 = vsel %vm175, %v354, %v355
  %357 = vrot.lane.b32.xlu0 %v354, 16
  %v358 = vpop.permute.xlu0 %357
  %359 = vrot.lane.b32.xlu0 %v356, 16
  %v360 = vpop.permute.xlu0 %359
  %361 = vrot.lane.b32.xlu0 %v355, 16
  %v362 = vpop.permute.xlu0 %361
  %366 = vst.msk [vmem:[#allocation2 + $0x18] sm:$0xc0] %vm203, %v358
  %367 = vst.msk [vmem:[#allocation2 + $0x28] sm:$0xff] %vm39, %v360
  %368 = vst.msk [vmem:[#allocation2 + $0x38] sm:$0xf] %vm206, %v362
  %v369 = vld [vmem:[%s349 + $0x1] sm:$0xff]
  %v370 = vld [vmem:[%s349 + $0x9] sm:$0x3f]
  %v373 = vrot.slane %v369, 2
  %v374 = vrot.slane %v370, 2
  %v375 = vsel %vm175, %v373, %v374
  %376 = vrot.lane.b32.xlu0 %v373, 32
  %v377 = vpop.permute.xlu0 %376
  %378 = vrot.lane.b32.xlu0 %v375, 32
  %v379 = vpop.permute.xlu0 %378
  %380 = vrot.lane.b32.xlu0 %v374, 32
  %v381 = vpop.permute.xlu0 %380
  %385 = vst.msk [vmem:[#allocation2 + $0x18] sm:$0xc0] %vm224, %v377
  %386 = vst.msk [vmem:[#allocation2 + $0x28] sm:$0xff] %vm53, %v379
  %387 = vst.msk [vmem:[#allocation2 + $0x38] sm:$0xf] %vm227, %v381
  %v388 = vld [vmem:[%s349 + $0x2] sm:$0xff]
  %v389 = vld [vmem:[%s349 + $0xa] sm:$0x3f]
  %v392 = vrot.slane %v388, 2
  %v393 = vrot.slane %v389, 2
  %v394 = vsel %vm175, %v392, %v393
  %395 = vrot.lane.b32.xlu0 %v392, 48
  %v396 = vpop.permute.xlu0 %395
  %397 = vrot.lane.b32.xlu0 %v394, 48
  %v398 = vpop.permute.xlu0 %397
  %399 = vrot.lane.b32.xlu0 %v393, 48
  %v400 = vpop.permute.xlu0 %399
  %404 = vst.msk [vmem:[#allocation2 + $0x18] sm:$0xc0] %vm246, %v396
  %405 = vst.msk [vmem:[#allocation2 + $0x28] sm:$0xff] %vm68, %v398
  %406 = vst.msk [vmem:[#allocation2 + $0x38] sm:$0xf] %vm249, %v400
  %v407 = vld [vmem:[#allocation2] sm:$0xff]
  %v408 = vld [vmem:[#allocation2 + $0x8] sm:$0xff]
  %v409 = vld [vmem:[#allocation2 + $0x10] sm:$0xff]
  %v410 = vld [vmem:[#allocation2 + $0x18] sm:$0xff]
  %v411 = vld [vmem:[#allocation2 + $0x20] sm:$0xff]
  %v412 = vld [vmem:[#allocation2 + $0x28] sm:$0xff]
  %v413 = vld [vmem:[#allocation2 + $0x30] sm:$0xf]
  %v414 = vld [vmem:[#allocation2 + $0x38] sm:$0xf]
  %v415 = vld [vmem:[%s0] sm:$0xff]
  %v416 = vld [vmem:[%s0 + $0x8] sm:$0xff]
  %v417 = vld [vmem:[%s0 + $0x10] sm:$0xff]
  %v418 = vld [vmem:[%s0 + $0x18] sm:$0xff]
  %v419 = vld [vmem:[%s0 + $0x20] sm:$0xff]
  %v420 = vld [vmem:[%s0 + $0x28] sm:$0xff]
  %v421 = vld [vmem:[%s0 + $0x30] sm:$0xff]
  %v422 = vld [vmem:[%s0 + $0x38] sm:$0xff]
  %v423 = vld [vmem:[%s0 + $0x40] sm:$0xff]
  %v424 = vld [vmem:[%s0 + $0x48] sm:$0xff]
  %v425 = vld [vmem:[%s0 + $0x50] sm:$0xff]
  %v426 = vld [vmem:[%s0 + $0x58] sm:$0xff]
  %v427 = vld [vmem:[%s0 + $0x60] sm:$0xff]
  %v428 = vld [vmem:[%s0 + $0x68] sm:$0xff]
  %v429 = vld [vmem:[%s0 + $0x70] sm:$0xff]
  %v430 = vld [vmem:[%s0 + $0x78] sm:$0xff]
  %v431 = vld [vmem:[%s0 + $0x80] sm:$0xff]
  %v432 = vld [vmem:[%s0 + $0x88] sm:$0xff]
  %v433 = vld [vmem:[%s0 + $0x90] sm:$0xff]
  %v434 = vld [vmem:[%s0 + $0x98] sm:$0xff]
  %v435 = vld [vmem:[%s0 + $0xa0] sm:$0xff]
  %v436 = vld [vmem:[%s0 + $0xa8] sm:$0xff]
  %v437 = vld [vmem:[%s0 + $0xb0] sm:$0xff]
  %v438 = vld [vmem:[%s0 + $0xb8] sm:$0xff]
  %v439 = vld [vmem:[%s1] sm:$0x1]
  %v441 = vlaneseq
  %v442 = vshrl.u32 %v441, 7
  %v443 = vsub.s32 0, %v442
  %v444 = vrot.slane %v439, %v443
  %vm446 = vcmask 523264
  %v448 = vsel %vm446, %v408, 0
  %v451 = vsel %vm446, %v410, 0
  %v454 = vsel %vm446, %v412, 0
  %v457 = vsel %vm446, %v414, 0
  %459 = vmatprep.subr.mxu0 0.0
  %460 = vmatpush1.msra.mxu0 %v415
  %461 = vmatprep.subr.mxu0 0.0
  %462 = vmatpush1.msra.mxu0 %v416
  %463 = vmatprep.subr.mxu0 0.0
  %464 = vmatpush1.msra.mxu0 %v417
  %465 = vmatprep.subr.mxu0 0.0
  %466 = vmatpush1.msra.mxu0 %v418
  %467 = vmatprep.subr.mxu0 0.0
  %468 = vmatpush1.msra.mxu0 %v419
  %469 = vmatprep.subr.mxu0 0.0
  %470 = vmatpush1.msra.mxu0 %v420
  %471 = vmatprep.subr.mxu0 0.0
  %472 = vmatpush1.msra.mxu0 %v421
  %473 = vmatprep.subr.mxu0 0.0
  %474 = vmatpush1.msra.mxu0 %v422
  %475 = vmatprep.subr.mxu0 0.0
  %476 = vmatpush1.msra.mxu0 %v423
  %477 = vmatprep.subr.mxu0 0.0
  %478 = vmatpush1.msra.mxu0 %v424
  %479 = vmatprep.subr.mxu0 0.0
  %480 = vmatpush1.msra.mxu0 %v425
  %481 = vmatprep.subr.mxu0 0.0
  %482 = vmatpush1.msra.mxu0 %v426
  %483 = vmatprep.subr.mxu0 0.0
  %484 = vmatpush1.msra.mxu0 %v427
  %485 = vmatprep.subr.mxu0 0.0
  %486 = vmatpush1.msra.mxu0 %v428
  %487 = vmatprep.subr.mxu0 0.0
  %488 = vmatpush1.msra.mxu0 %v429
  %489 = vmatprep.subr.mxu0 0.0
  %490 = vmatpush1.msra.mxu0 %v430
  %491 = vmatprep.subr.mxu0 0.0
  %492 = vmatpush1.msra.mxu0 %v431
  %493 = vmatprep.subr.mxu0 0.0
  %494 = vmatpush1.msra.mxu0 %v432
  %495 = vmatprep.subr.mxu0 0.0
  %496 = vmatpush1.msra.mxu0 %v433
  %497 = vmatprep.subr.mxu0 0.0
  %498 = vmatpush1.msra.mxu0 %v434
  %499 = vmatprep.subr.mxu0 0.0
  %500 = vmatpush1.msra.mxu0 %v435
  %501 = vmatprep.subr.mxu0 0.0
  %502 = vmatpush1.msra.mxu0 %v436
  %503 = vmatprep.subr.mxu0 0.0
  %504 = vmatpush1.msra.mxu0 %v437
  %505 = vmatprep.subr.mxu0 0.0
  %506 = vmatpush1.msra.mxu0 %v438
  %507 = vmatprep.subr.mxu0 0.0
  %508 = vmatpush1.msra.mxu0 0.0
  %509 = vmatprep.subr.mxu0 0.0
  %510 = vmatpush1.msra.mxu0 0.0
  %511 = vmatprep.subr.mxu0 0.0
  %512 = vmatpush1.msra.mxu0 0.0
  %513 = vmatprep.subr.mxu0 0.0
  %514 = vmatpush1.msra.mxu0 0.0
  %515 = vmatprep.subr.mxu0 0.0
  %516 = vmatpush1.msra.mxu0 0.0
  %517 = vmatprep.subr.mxu0 0.0
  %518 = vmatpush1.msra.mxu0 0.0
  %519 = vmatprep.subr.mxu0 0.0
  %520 = vmatpush1.msra.mxu0 0.0
  %521 = vmatprep.subr.mxu0 0.0
  %522 = vmatpush1.msra.mxu0 0.0
  %523 = vmatprep.mubr.f32.mxu0 %v448
  %524 = vmatmul.mubr.f32.gmra.mrb[0].mxu0 %v407
  %v525 = vpop.f32.mrb[0].mxu0
  %v526 = vadd.f32 %v444, %v525
  %v527 = vpop.f32.mrb[0].mxu0
  %528 = vmatprep.mubr.f32.mxu0 %v451
  %529 = vmatmul.mubr.f32.gmra.mrb[0].mxu0 %v409
  %v530 = vpop.f32.mrb[0].mxu0
  %v531 = vadd.f32 %v444, %v530
  %v532 = vpop.f32.mrb[0].mxu0
  %533 = vmatprep.mubr.f32.mxu0 %v454
  %534 = vmatmul.mubr.f32.gmra.mrb[0].mxu0 %v411
  %v535 = vpop.f32.mrb[0].mxu0
  %v536 = vadd.f32 %v444, %v535
  %v537 = vpop.f32.mrb[0].mxu0
  %538 = vmatprep.mubr.f32.mxu0 %v457
  %539 = vmatmul.mubr.f32.gmra.mrb[0].mxu0 %v413
  %v540 = vpop.f32.mrb[0].mxu0
  %v541 = vadd.f32 %v444, %v540
  %v542 = vpop.f32.mrb[0].mxu0
  %543 = vdwg.mxu0
  %v544 = vmax.f32 %v526, 0.0
  %v545 = vmax.f32 %v531, 0.0
  %v546 = vmax.f32 %v536, 0.0
  %v547 = vmax.f32 %v541, 0.0
  %v548 = vld [vmem:[%s3] sm:$0xff]
  %v549 = vld [vmem:[%s3 + $0x8] sm:$0x3f]
  %vm550 = vcmask 228352
  %v552 = vsel %vm550, %v548, 0
  %v555 = vsel %vm550, %v549, 0
  %vm557 = vcmask 1043456
  %v559 = vsel %vm557, %v547, 0
  %561 = vmatprep.subr.mxu0 0.0
  %562 = vmatpush1.msra.mxu0 %v544
  %563 = vmatprep.subr.mxu0 0.0
  %564 = vmatpush1.msra.mxu0 %v545
  %565 = vmatprep.subr.mxu0 0.0
  %566 = vmatpush1.msra.mxu0 %v546
  %567 = vmatprep.subr.mxu0 0.0
  %568 = vmatpush1.msra.mxu0 %v559
  %569 = vmatprep.subr.mxu0 0.0
  %570 = vmatpush1.msra.mxu0 0.0
  %571 = vmatprep.subr.mxu0 0.0
  %572 = vmatpush1.msra.mxu0 0.0
  %573 = vmatprep.subr.mxu0 0.0
  %574 = vmatpush1.msra.mxu0 0.0
  %575 = vmatprep.subr.mxu0 0.0
  %576 = vmatpush1.msra.mxu0 0.0
  %577 = vmatprep.subr.mxu0 0.0
  %578 = vmatpush1.msra.mxu0 0.0
  %579 = vmatprep.subr.mxu0 0.0
  %580 = vmatpush1.msra.mxu0 0.0
  %581 = vmatprep.subr.mxu0 0.0
  %582 = vmatpush1.msra.mxu0 0.0
  %583 = vmatprep.subr.mxu0 0.0
  %584 = vmatpush1.msra.mxu0 0.0
  %585 = vmatprep.subr.mxu0 0.0
  %586 = vmatpush1.msra.mxu0 0.0
  %587 = vmatprep.subr.mxu0 0.0
  %588 = vmatpush1.msra.mxu0 0.0
  %589 = vmatprep.subr.mxu0 0.0
  %590 = vmatpush1.msra.mxu0 0.0
  %591 = vmatprep.subr.mxu0 0.0
  %592 = vmatpush1.msra.mxu0 0.0
  %593 = vmatprep.subr.mxu0 0.0
  %594 = vmatpush1.msra.mxu0 0.0
  %595 = vmatprep.subr.mxu0 0.0
  %596 = vmatpush1.msra.mxu0 0.0
  %597 = vmatprep.subr.mxu0 0.0
  %598 = vmatpush1.msra.mxu0 0.0
  %599 = vmatprep.subr.mxu0 0.0
  %600 = vmatpush1.msra.mxu0 0.0
  %601 = vmatprep.subr.mxu0 0.0
  %602 = vmatpush1.msra.mxu0 0.0
  %603 = vmatprep.subr.mxu0 0.0
  %604 = vmatpush1.msra.mxu0 0.0
  %605 = vmatprep.subr.mxu0 0.0
  %606 = vmatpush1.msra.mxu0 0.0
  %607 = vmatprep.subr.mxu0 0.0
  %608 = vmatpush1.msra.mxu0 0.0
  %609 = vmatprep.subr.mxu0 0.0
  %610 = vmatpush1.msra.mxu0 0.0
  %611 = vmatprep.subr.mxu0 0.0
  %612 = vmatpush1.msra.mxu0 0.0
  %613 = vmatprep.subr.mxu0 0.0
  %614 = vmatpush1.msra.mxu0 0.0
  %615 = vmatprep.subr.mxu0 0.0
  %616 = vmatpush1.msra.mxu0 0.0
  %617 = vmatprep.subr.mxu0 0.0
  %618 = vmatpush1.msra.mxu0 0.0
  %619 = vmatprep.subr.mxu0 0.0
  %620 = vmatpush1.msra.mxu0 0.0
  %621 = vmatprep.subr.mxu0 0.0
  %622 = vmatpush1.msra.mxu0 0.0
  %623 = vmatprep.subr.mxu0 0.0
  %624 = vmatpush1.msra.mxu0 0.0
  %625 = vmatprep.mubr.f32.mxu0 0.0
  %626 = vmatmul.mubr.f32.gmra.mrb[0].mxu0 %v552
  %v627 = vpop.f32.mrb[0].mxu0
  %v628 = vadd.f32 0.0, %v627
  %v629 = vpop.f32.mrb[0].mxu0
  %630 = vmatprep.mubr.f32.mxu0 0.0
  %631 = vmatmul.mubr.f32.gmra.mrb[0].mxu0 %v555
  %v632 = vpop.f32.mrb[0].mxu0
  %v633 = vadd.f32 0.0, %v632
  %v634 = vpop.f32.mrb[0].mxu0
  %635 = vdwg.mxu0
  %v636 = vld [vmem:[%s4] sm:$0xff]
  %v637 = vld [vmem:[%s4 + $0x8] sm:$0xff]
  %v638 = vld [vmem:[%s4 + $0x10] sm:$0xff]
  %v639 = vld [vmem:[%s4 + $0x18] sm:$0xff]
  %v640 = vld [vmem:[%s4 + $0x20] sm:$0xff]
  %v641 = vld [vmem:[%s4 + $0x28] sm:$0xff]
  %v642 = vld [vmem:[%s4 + $0x30] sm:$0xff]
  %v643 = vld [vmem:[%s4 + $0x38] sm:$0xff]
  %v644 = vld [vmem:[%s4 + $0x40] sm:$0xff]
  %v645 = vld [vmem:[%s4 + $0x48] sm:$0xff]
  %v646 = vld [vmem:[%s4 + $0x50] sm:$0xff]
  %v647 = vld [vmem:[%s4 + $0x58] sm:$0xff]
  %v648 = vld [vmem:[%s4 + $0x60] sm:$0xff]
  %v649 = vld [vmem:[%s4 + $0x68] sm:$0xff]
  %vm650 = vcmask 916480
  %v652 = vsel %vm650, %v628, 0
  %v655 = vsel %vm650, %v633, 0
  %657 = vmatprep.subr.mxu0 0.0
  %658 = vmatpush1.msra.mxu0 %v636
  %659 = vmatprep.subr.mxu0 0.0
  %660 = vmatpush1.msra.mxu0 %v637
  %661 = vmatprep.subr.mxu0 0.0
  %662 = vmatpush1.msra.mxu0 %v638
  %663 = vmatprep.subr.mxu0 0.0
  %664 = vmatpush1.msra.mxu0 %v639
  %665 = vmatprep.subr.mxu0 0.0
  %666 = vmatpush1.msra.mxu0 %v640
  %667 = vmatprep.subr.mxu0 0.0
  %668 = vmatpush1.msra.mxu0 %v641
  %669 = vmatprep.subr.mxu0 0.0
  %670 = vmatpush1.msra.mxu0 %v642
  %671 = vmatprep.subr.mxu0 0.0
  %672 = vmatpush1.msra.mxu0 %v643
  %673 = vmatprep.subr.mxu0 0.0
  %674 = vmatpush1.msra.mxu0 %v644
  %675 = vmatprep.subr.mxu0 0.0
  %676 = vmatpush1.msra.mxu0 %v645
  %677 = vmatprep.subr.mxu0 0.0
  %678 = vmatpush1.msra.mxu0 %v646
  %679 = vmatprep.subr.mxu0 0.0
  %680 = vmatpush1.msra.mxu0 %v647
  %681 = vmatprep.subr.mxu0 0.0
  %682 = vmatpush1.msra.mxu0 %v648
  %683 = vmatprep.subr.mxu0 0.0
  %684 = vmatpush1.msra.mxu0 %v649
  %685 = vmatprep.subr.mxu0 0.0
  %686 = vmatpush1.msra.mxu0 0.0
  %687 = vmatprep.subr.mxu0 0.0
  %688 = vmatpush1.msra.mxu0 0.0
  %689 = vmatprep.subr.mxu0 0.0
  %690 = vmatpush1.msra.mxu0 0.0
  %691 = vmatprep.subr.mxu0 0.0
  %692 = vmatpush1.msra.mxu0 0.0
  %693 = vmatprep.subr.mxu0 0.0
  %694 = vmatpush1.msra.mxu0 0.0
  %695 = vmatprep.subr.mxu0 0.0
  %696 = vmatpush1.msra.mxu0 0.0
  %697 = vmatprep.subr.mxu0 0.0
  %698 = vmatpush1.msra.mxu0 0.0
  %699 = vmatprep.subr.mxu0 0.0
  %700 = vmatpush1.msra.mxu0 0.0
  %701 = vmatprep.subr.mxu0 0.0
  %702 = vmatpush1.msra.mxu0 0.0
  %703 = vmatprep.subr.mxu0 0.0
  %704 = vmatpush1.msra.mxu0 0.0
  %705 = vmatprep.subr.mxu0 0.0
  %706 = vmatpush1.msra.mxu0 0.0
  %707 = vmatprep.subr.mxu0 0.0
  %708 = vmatpush1.msra.mxu0 0.0
  %709 = vmatprep.subr.mxu0 0.0
  %710 = vmatpush1.msra.mxu0 0.0
  %711 = vmatprep.subr.mxu0 0.0
  %712 = vmatpush1.msra.mxu0 0.0
  %713 = vmatprep.subr.mxu0 0.0
  %714 = vmatpush1.msra.mxu0 0.0
  %715 = vmatprep.subr.mxu0 0.0
  %716 = vmatpush1.msra.mxu0 0.0
  %717 = vmatprep.subr.mxu0 0.0
  %718 = vmatpush1.msra.mxu0 0.0
  %719 = vmatprep.subr.mxu0 0.0
  %720 = vmatpush1.msra.mxu0 0.0
  %721 = vmatprep.mubr.f32.mxu0 0.0
  %722 = vmatmul.mubr.f32.gmra.mrb[0].mxu0 %v652
  %v723 = vpop.f32.mrb[0].mxu0
  %v724 = vadd.f32 0.0, %v723
  %v725 = vpop.f32.mrb[0].mxu0
  %726 = vmatprep.mubr.f32.mxu0 0.0
  %727 = vmatmul.mubr.f32.gmra.mrb[0].mxu0 %v655
  %v728 = vpop.f32.mrb[0].mxu0
  %v729 = vadd.f32 0.0, %v728
  %v730 = vpop.f32.mrb[0].mxu0
  %731 = vdwg.mxu0
  %v732 = vld [vmem:[%s2] sm:$0xff]
  %v733 = vld [vmem:[%s2 + $0x8] sm:$0x3f]
  %v734 = vmul.f32 %v724, %v732
  %v735 = vmul.f32 %v729, %v733
  %vm736 = vcmask 457728
  %737 = vst.msk [vmem:[%s6] sm:$0xff] %vm736, %v734
  %vm738 = vcmask 455680
  %739 = vst.msk [vmem:[%s6 + $0x8] sm:$0x3f] %vm738, %v735
  // Predicated region
  $region26: #{conv_block_forward.1} parent=0 // pred_check
    _
  $region27: #{conv_block_forward.1} parent=0 // pred_check_branch
    %741 = sbr.rel (0) target = $region29
  $region28: #{conv_block_forward.1} parent=0 // pred_region
    _
  $region29: #{conv_block_forward.1} parent=0 // pred_fallthru
    _
  // Predicated region
  $region30: #{conv_block_forward.1} parent=0 // pred_check
    _
  $region31: #{conv_block_forward.1} parent=0 // pred_check_branch
    %743 = sbr.rel (0) target = $region33
  $region32: #{conv_block_forward.1} parent=0 // pred_region
    _
  $region33: #{conv_block_forward.1} parent=0 // pred_fallthru
    _

</llo_original>
